<compile_context>
chip_gen: v6e
topology: v6e:2x2x1
jax: 0.10.0
libtpu: 0.0.40
codegen_flags: <defaults>
</compile_context>

<pallas_src>
import jax
import jax.numpy as jnp
from jax.experimental import pallas as pl
from jax.experimental.pallas import tpu as pltpu

_LANES = 128
_ROW_QUANT = 24   # divisible by 3 (column period) and 8 (sublane tile)


def _cdiv(a, b):
    return -(-a // b)


def _round_up(a, b):
    return _cdiv(a, b) * b


def _make_kernel(n_classes):
    """Kernel closure over the (static) number of classes."""

    def kernel(cls_vals_ref, cls_wts_ref, m0_ref, p_ref, t_ref, out_ref, acc_ref):
        k = pl.program_id(1)                      # reduction step within split

        @pl.when(k == 0)
        def _():
            acc_ref[...] = jnp.zeros_like(acc_ref)

        # f32 math regardless of input dtype.
        p = p_ref[...].astype(jnp.float32)        # (block_rows, 128)
        t = t_ref[...].astype(jnp.float32)
        m0 = m0_ref[...]                          # 1.0 where flat index % 3 == 0

        d = p - t
        sq = d * d

        # Class-weight lookup: K scalar-broadcast compare+selects (no adds).
        # Spurious matches at column-1/2 positions are zeroed by m0 below.
        w = jnp.zeros_like(t)
        for j in range(n_classes):
            w = jnp.where(t == cls_vals_ref[j], cls_wts_ref[j], w)

        w_m0 = w * m0                             # per-sample weight (col-0 lanes)
        sq_m0 = sq * m0

        s_w = jnp.sum(w_m0, axis=0, keepdims=True)              # (1, 128)
        s_0 = jnp.sum(w_m0 * sq, axis=0, keepdims=True)
        s_12 = (jnp.sum(sq, axis=0, keepdims=True)
                - jnp.sum(sq_m0, axis=0, keepdims=True))

        acc_ref[0:1, :] += s_w
        acc_ref[1:2, :] += s_0
        acc_ref[2:3, :] += s_12

        @pl.when(k == pl.num_programs(1) - 1)
        def _():
            out_ref[...] = acc_ref[...]           # aligned (8,128) store, once

    return kernel


def weighted_mse_loss(preds, targets, class_values, class_weights, *,
                      block_rows=4224, num_splits=1, core_parallel_splits=False):
    """preds, targets: (N, 3). class_values/class_weights: (K,). Returns f32 scalar."""
    n, c = preds.shape
    assert c == 3
    total = n * c

    cls_vals = jnp.asarray(class_values, dtype=jnp.float32)
    cls_wts = jnp.asarray(class_weights, dtype=jnp.float32)
    n_classes = int(cls_vals.shape[0])

    # Row-block sizing: multiple of 24, shrunk for small inputs.
    rows_needed = _cdiv(total, _LANES)
    block_rows = max(_ROW_QUANT,
                     min(_round_up(block_rows, _ROW_QUANT),
                         _round_up(rows_needed, _ROW_QUANT)))
    blocks_per_split = max(1, _cdiv(rows_needed, num_splits * block_rows))
    padded_rows = num_splits * blocks_per_split * block_rows
    padded_total = padded_rows * _LANES

    # Sentinel padding: identical in preds/targets (=> d = 0) and strictly
    # below every class value (=> weight 0), so no validity mask is needed.
    sentinel = jnp.min(cls_vals) - 1.0

    p_flat = preds.reshape(-1)
    t_flat = targets.reshape(-1)
    pad = padded_total - total
    if pad:
        p_flat = jnp.pad(p_flat, (0, pad), constant_values=sentinel)
        t_flat = jnp.pad(t_flat, (0, pad), constant_values=sentinel)
    p2 = p_flat.reshape(padded_rows, _LANES)
    t2 = t_flat.reshape(padded_rows, _LANES)

    # "Is column 0" mask for one block; valid for every block because
    # block_rows % 3 == 0 => each block starts at a flat offset == 0 (mod 3).
    flat_in_block = (jnp.arange(block_rows, dtype=jnp.int32)[:, None] * _LANES
                     + jnp.arange(_LANES, dtype=jnp.int32)[None, :])
    col0_mask = (flat_in_block % 3 == 0).astype(jnp.float32)

    bps = blocks_per_split
    data_spec = pl.BlockSpec((block_rows, _LANES), lambda i, k: (i * bps + k, 0))
    mask_spec = pl.BlockSpec((block_rows, _LANES), lambda i, k: (0, 0))  # resident
    smem_spec = pl.BlockSpec(memory_space=pltpu.MemorySpace.SMEM)

    if num_splits > 1 and core_parallel_splits:
        # v7x: shard the split axis across the two TensorCores.
        dim_sems = (pltpu.CORE_PARALLEL, pltpu.ARBITRARY)
    else:
        dim_sems = ("parallel", "arbitrary")

    partials = pl.pallas_call(
        _make_kernel(n_classes),
        grid=(num_splits, blocks_per_split),
        in_specs=[
            smem_spec,    # class values (K,) f32 in SMEM
            smem_spec,    # class weights (K,) f32 in SMEM
            mask_spec,    # column-0 mask, VMEM resident
            data_spec,    # preds, lane-dense stream
            data_spec,    # targets, lane-dense stream
        ],
        out_specs=pl.BlockSpec((None, 8, _LANES), lambda i, k: (i, 0, 0)),
        out_shape=jax.ShapeDtypeStruct((num_splits, 8, _LANES), jnp.float32),
        scratch_shapes=[pltpu.VMEM((8, _LANES), jnp.float32)],
        compiler_params=pltpu.CompilerParams(
            dimension_semantics=dim_sems,
            vmem_limit_bytes=32 * 1024 * 1024),
    )(cls_vals, cls_wts, col0_mask, p2, t2)

    # Tiny finalize: combine splits + lanes, then the loss (kept in f32).
    sums = jnp.sum(partials[:, :3, :], axis=(0, 2))   # (3,) = [S_w, S0, S12]
    mean_w = sums[0] / n
    return (sums[1] + mean_w * sums[2]) / (n * c)


def _reference(preds, targets, class_values, class_weights):
    score_targets = targets[:, 0]
    idx = jnp.argmax(score_targets[:, None] == class_values[None, :], axis=1)
    w = class_weights[idx]
    mw = w.mean()
    return jnp.stack(
        [w * (preds[:, 0] - targets[:, 0]) ** 2,
         mw * (preds[:, 1] - targets[:, 1]) ** 2,
         mw * (preds[:, 2] - targets[:, 2]) ** 2], axis=1).mean()


def _make_inputs(key, n, class_values):
    k1, k2, k3 = jax.random.split(key, 3)
    score_targets = class_values[jax.random.randint(k1, (n,), 0, class_values.shape[0])]
    other_targets = jax.random.normal(k2, (n, 2), dtype=jnp.float32)
    targets = jnp.concatenate([score_targets[:, None], other_targets], axis=1)
    preds = jax.random.normal(k3, (n, 3), dtype=jnp.float32)
    return preds, targets


if __name__ == "__main__":
    key = jax.random.PRNGKey(0)
    k_a, k_b = jax.random.split(key, 2)

    # Deterministic synthetic class-weight table (mimics total/count weights).
    class_values = jnp.array([0.0, 1.0, 2.0, 3.0], dtype=jnp.float32)
    class_counts = jnp.array([4.0, 2.0, 1.0, 1.0], dtype=jnp.float32)
    class_weights = class_counts.sum() / class_counts          # total / count

    # Small batch: single (partial, sentinel-padded) block.
    preds_a, targets_a = _make_inputs(k_a, 8, class_values)
    loss_a = jax.block_until_ready(
        weighted_mse_loss(preds_a, targets_a, class_values, class_weights))
    ref_a = _reference(preds_a, targets_a, class_values, class_weights)
    assert jnp.allclose(loss_a, ref_a, rtol=1e-5, atol=1e-5), (loss_a, ref_a)

    # Larger batch, tiny blocks: several reduction steps on one split.
    preds_b, targets_b = _make_inputs(k_b, 2000, class_values)
    loss_b = jax.block_until_ready(
        weighted_mse_loss(preds_b, targets_b, class_values, class_weights,
                          block_rows=24))
    ref_b = _reference(preds_b, targets_b, class_values, class_weights)
    assert jnp.allclose(loss_b, ref_b, rtol=1e-5, atol=1e-5), (loss_b, ref_b)

    # Same data with two splits (v7x-style partials, combined in the wrapper).
    loss_c = jax.block_until_ready(
        weighted_mse_loss(preds_b, targets_b, class_values, class_weights,
                          block_rows=24, num_splits=2))
    assert jnp.allclose(loss_c, ref_b, rtol=1e-5, atol=1e-5), (loss_c, ref_b)

    print("KERNEL_OK")
</pallas_src>

<mosaic_0001>
module attributes {stable_mosaic.version = 11 : i64} {
  func.func @kernel(%arg0: i32, %arg1: i32, %arg2: memref<4xf32, #tpu.memory_space<smem>>, %arg3: memref<4xf32, #tpu.memory_space<smem>>, %arg4: memref<24x128xf32, #tpu.memory_space<vmem>>, %arg5: memref<24x128xf32, #tpu.memory_space<vmem>>, %arg6: memref<24x128xf32, #tpu.memory_space<vmem>>, %arg7: memref<1x8x128xf32, #tpu.memory_space<vmem>>, %arg8: memref<8x128xf32, #tpu.memory_space<vmem>>) attributes {dimension_semantics = [#tpu.dimension_semantics<parallel>, #tpu.dimension_semantics<arbitrary>], iteration_bounds = array<i64: 1, 1>, scalar_prefetch = 0 : i64, scratch_operands = 1 : i64, tpu.core_type = #tpu.core_type<tc>, window_params = [{transform_indices = @transform_0, window_bounds = array<i64: 4>}, {transform_indices = @transform_1, window_bounds = array<i64: 4>}, {pipeline_mode = #tpu.pipeline_mode<synchronous>, transform_indices = @transform_2, window_bounds = array<i64: 24, 128>}, {transform_indices = @transform_3, window_bounds = array<i64: 24, 128>}, {transform_indices = @transform_4, window_bounds = array<i64: 24, 128>}, {transform_indices = @transform_5, window_bounds = array<i64: 1, 8, 128>}]} {
    %c0_i32 = arith.constant 0 : i32
    %0 = arith.cmpi eq, %arg1, %c0_i32 : i32
    %1 = arith.extui %0 : i1 to i32
    %c0_i32_0 = arith.constant 0 : i32
    %2 = arith.cmpi ne, %1, %c0_i32_0 : i32
    scf.if %2 {
      %cst_29 = arith.constant 0.000000e+00 : f32
      %57 = vector.broadcast %cst_29 : f32 to vector<8x128xf32>
      %c0_30 = arith.constant 0 : index
      %c0_31 = arith.constant 0 : index
      %58 = vector.load %arg8[%c0_30, %c0_31] : memref<8x128xf32, #tpu.memory_space<vmem>>, vector<8x128xf32>
      tpu.vector_store %arg8[%c0_30, %c0_31], %57 {strides = array<i32>} : memref<8x128xf32, #tpu.memory_space<vmem>>, vector<8x128xf32>,
    } else {
    }
    %c0 = arith.constant 0 : index
    %c0_1 = arith.constant 0 : index
    %3 = vector.load %arg5[%c0, %c0_1] : memref<24x128xf32, #tpu.memory_space<vmem>>, vector<24x128xf32>
    %c0_2 = arith.constant 0 : index
    %c0_3 = arith.constant 0 : index
    %4 = vector.load %arg6[%c0_2, %c0_3] : memref<24x128xf32, #tpu.memory_space<vmem>>, vector<24x128xf32>
    %c0_4 = arith.constant 0 : index
    %c0_5 = arith.constant 0 : index
    %5 = vector.load %arg4[%c0_4, %c0_5] : memref<24x128xf32, #tpu.memory_space<vmem>>, vector<24x128xf32>
    %6 = arith.subf %3, %4 : vector<24x128xf32>
    %7 = arith.mulf %6, %6 : vector<24x128xf32>
    %cst = arith.constant 0.000000e+00 : f32
    %8 = vector.broadcast %cst : f32 to vector<24x128xf32>
    %c0_6 = arith.constant 0 : index
    %9 = memref.load %arg2[%c0_6] : memref<4xf32, #tpu.memory_space<smem>>
    %10 = vector.broadcast %9 : f32 to vector<24x128xf32>
    %11 = arith.cmpf oeq, %4, %10 : vector<24x128xf32>
    %c0_7 = arith.constant 0 : index
    %12 = memref.load %arg3[%c0_7] : memref<4xf32, #tpu.memory_space<smem>>
    %13 = vector.broadcast %12 : f32 to vector<24x128xf32>
    %14 = arith.select %11, %13, %8 : vector<24x128xi1>, vector<24x128xf32>
    %c1 = arith.constant 1 : index
    %15 = memref.load %arg2[%c1] : memref<4xf32, #tpu.memory_space<smem>>
    %16 = vector.broadcast %15 : f32 to vector<24x128xf32>
    %17 = arith.cmpf oeq, %4, %16 : vector<24x128xf32>
    %c1_8 = arith.constant 1 : index
    %18 = memref.load %arg3[%c1_8] : memref<4xf32, #tpu.memory_space<smem>>
    %19 = vector.broadcast %18 : f32 to vector<24x128xf32>
    %20 = arith.select %17, %19, %14 : vector<24x128xi1>, vector<24x128xf32>
    %c2 = arith.constant 2 : index
    %21 = memref.load %arg2[%c2] : memref<4xf32, #tpu.memory_space<smem>>
    %22 = vector.broadcast %21 : f32 to vector<24x128xf32>
    %23 = arith.cmpf oeq, %4, %22 : vector<24x128xf32>
    %c2_9 = arith.constant 2 : index
    %24 = memref.load %arg3[%c2_9] : memref<4xf32, #tpu.memory_space<smem>>
    %25 = vector.broadcast %24 : f32 to vector<24x128xf32>
    %26 = arith.select %23, %25, %20 : vector<24x128xi1>, vector<24x128xf32>
    %c3 = arith.constant 3 : index
    %27 = memref.load %arg2[%c3] : memref<4xf32, #tpu.memory_space<smem>>
    %28 = vector.broadcast %27 : f32 to vector<24x128xf32>
    %29 = arith.cmpf oeq, %4, %28 : vector<24x128xf32>
    %c3_10 = arith.constant 3 : index
    %30 = memref.load %arg3[%c3_10] : memref<4xf32, #tpu.memory_space<smem>>
    %31 = vector.broadcast %30 : f32 to vector<24x128xf32>
    %32 = arith.select %29, %31, %26 : vector<24x128xi1>, vector<24x128xf32>
    %33 = arith.mulf %32, %5 : vector<24x128xf32>
    %34 = arith.mulf %7, %5 : vector<24x128xf32>
    %cst_11 = arith.constant dense<0.000000e+00> : vector<128xf32>
    %35 = vector.multi_reduction <add>, %33, %cst_11 [0] : vector<24x128xf32> to vector<128xf32>
    %36 = vector.shape_cast %35 : vector<128xf32> to vector<1x128xf32>
    %37 = arith.mulf %33, %7 : vector<24x128xf32>
    %cst_12 = arith.constant dense<0.000000e+00> : vector<128xf32>
    %38 = vector.multi_reduction <add>, %37, %cst_12 [0] : vector<24x128xf32> to vector<128xf32>
    %39 = vector.shape_cast %38 : vector<128xf32> to vector<1x128xf32>
    %cst_13 = arith.constant dense<0.000000e+00> : vector<128xf32>
    %40 = vector.multi_reduction <add>, %7, %cst_13 [0] : vector<24x128xf32> to vector<128xf32>
    %41 = vector.shape_cast %40 : vector<128xf32> to vector<1x128xf32>
    %cst_14 = arith.constant dense<0.000000e+00> : vector<128xf32>
    %42 = vector.multi_reduction <add>, %34, %cst_14 [0] : vector<24x128xf32> to vector<128xf32>
    %43 = vector.shape_cast %42 : vector<128xf32> to vector<1x128xf32>
    %44 = arith.subf %41, %43 : vector<1x128xf32>
    %c0_15 = arith.constant 0 : index
    %c0_16 = arith.constant 0 : index
    %45 = vector.load %arg8[%c0_15, %c0_16] : memref<8x128xf32, #tpu.memory_space<vmem>>, vector<1x128xf32>
    %46 = arith.addf %45, %36 : vector<1x128xf32>
    %c0_17 = arith.constant 0 : index
    %c0_18 = arith.constant 0 : index
    %47 = vector.load %arg8[%c0_17, %c0_18] : memref<8x128xf32, #tpu.memory_space<vmem>>, vector<1x128xf32>
    tpu.vector_store %arg8[%c0_17, %c0_18], %46 {strides = array<i32>} : memref<8x128xf32, #tpu.memory_space<vmem>>, vector<1x128xf32>,
    %c1_19 = arith.constant 1 : index
    %c0_20 = arith.constant 0 : index
    %48 = vector.load %arg8[%c1_19, %c0_20] : memref<8x128xf32, #tpu.memory_space<vmem>>, vector<1x128xf32>
    %49 = arith.addf %48, %39 : vector<1x128xf32>
    %c1_21 = arith.constant 1 : index
    %c0_22 = arith.constant 0 : index
    %50 = vector.load %arg8[%c1_21, %c0_22] : memref<8x128xf32, #tpu.memory_space<vmem>>, vector<1x128xf32>
    tpu.vector_store %arg8[%c1_21, %c0_22], %49 {strides = array<i32>} : memref<8x128xf32, #tpu.memory_space<vmem>>, vector<1x128xf32>,
    %c2_23 = arith.constant 2 : index
    %c0_24 = arith.constant 0 : index
    %51 = vector.load %arg8[%c2_23, %c0_24] : memref<8x128xf32, #tpu.memory_space<vmem>>, vector<1x128xf32>
    %52 = arith.addf %51, %44 : vector<1x128xf32>
    %c2_25 = arith.constant 2 : index
    %c0_26 = arith.constant 0 : index
    %53 = vector.load %arg8[%c2_25, %c0_26] : memref<8x128xf32, #tpu.memory_space<vmem>>, vector<1x128xf32>
    tpu.vector_store %arg8[%c2_25, %c0_26], %52 {strides = array<i32>} : memref<8x128xf32, #tpu.memory_space<vmem>>, vector<1x128xf32>,
    %c0_i32_27 = arith.constant 0 : i32
    %54 = arith.cmpi eq, %arg1, %c0_i32_27 : i32
    %55 = arith.extui %54 : i1 to i32
    %c0_i32_28 = arith.constant 0 : i32
    %56 = arith.cmpi ne, %55, %c0_i32_28 : i32
    scf.if %56 {
      %c0_29 = arith.constant 0 : index
      %c0_30 = arith.constant 0 : index
      %57 = vector.load %arg8[%c0_29, %c0_30] : memref<8x128xf32, #tpu.memory_space<vmem>>, vector<8x128xf32>
      %c0_31 = arith.constant 0 : index
      %c0_32 = arith.constant 0 : index
      %c0_33 = arith.constant 0 : index
      %58 = vector.load %arg7[%c0_31, %c0_32, %c0_33] : memref<1x8x128xf32, #tpu.memory_space<vmem>>, vector<1x8x128xf32>
      %59 = vector.shape_cast %58 : vector<1x8x128xf32> to vector<8x128xf32>
      %60 = vector.shape_cast %57 : vector<8x128xf32> to vector<1x8x128xf32>
      tpu.vector_store %arg7[%c0_31, %c0_32, %c0_33], %60 {strides = array<i32>} : memref<1x8x128xf32, #tpu.memory_space<vmem>>, vector<1x8x128xf32>,
    } else {
    }
    return
  }
  func.func @transform_0(%arg0: i32, %arg1: i32) -> i32 {
    %c0_i32 = arith.constant 0 : i32
    %c0_i32_0 = arith.constant 0 : i32
    return %c0_i32 : i32
  }
  func.func @transform_1(%arg0: i32, %arg1: i32) -> i32 {
    %c0_i32 = arith.constant 0 : i32
    %c0_i32_0 = arith.constant 0 : i32
    return %c0_i32 : i32
  }
  func.func @transform_2(%arg0: i32, %arg1: i32) -> (i32, i32) {
    %c0_i32 = arith.constant 0 : i32
    %c0_i32_0 = arith.constant 0 : i32
    %c0_i32_1 = arith.constant 0 : i32
    return %c0_i32, %c0_i32_0 : i32, i32
  }
  func.func @transform_3(%arg0: i32, %arg1: i32) -> (i32, i32) {
    %c1_i32 = arith.constant 1 : i32
    %0 = arith.muli %arg0, %c1_i32 : i32
    %1 = arith.addi %0, %arg1 : i32
    %c0_i32 = arith.constant 0 : i32
    %c0_i32_0 = arith.constant 0 : i32
    return %1, %c0_i32 : i32, i32
  }
  func.func @transform_4(%arg0: i32, %arg1: i32) -> (i32, i32) {
    %c1_i32 = arith.constant 1 : i32
    %0 = arith.muli %arg0, %c1_i32 : i32
    %1 = arith.addi %0, %arg1 : i32
    %c0_i32 = arith.constant 0 : i32
    %c0_i32_0 = arith.constant 0 : i32
    return %1, %c0_i32 : i32, i32
  }
  func.func @transform_5(%arg0: i32, %arg1: i32) -> (i32, i32, i32) {
    %c0_i32 = arith.constant 0 : i32
    %c0_i32_0 = arith.constant 0 : i32
    %c0_i32_1 = arith.constant 0 : i32
    return %arg0, %c0_i32, %c0_i32_0 : i32, i32, i32
  }
}

</mosaic_0001>

<llo_original>
// kernel: tpu_custom_call.1
$region0: #{tpu_custom_call.1}
  #allocation0 [shape = 'u32[]', space=smem, size = 0x4, offset = 0x4, fixed_abs, tag = 'smem constant byte address 0x4 - core index']
  #allocation1 [shape = 'u32[144,128]{1,0:T(1,128)}', space=vmem, size = 0x12000, scoped, tag = 'internal scratch']
  #allocation2 [shape = 'f32[8,128]{1,0:T(8,128)}', space=vmem, size = 0x1000, scoped, tag = 'scratch operand']
  %s0 = inlined_call_operand.hbm [shape: f32[4], index: 0, kind: input, shape index: {}]
  %s1 = inlined_call_operand.vmem [shape: f32[4], index: 1, kind: input, shape index: {}]
  %s2 = inlined_call_operand.hbm [shape: f32[24,128], index: 2, kind: input, shape index: {}]
  %s3 = inlined_call_operand.hbm [shape: f32[24,128], index: 3, kind: input, shape index: {}]
  %s4 = inlined_call_operand.hbm [shape: f32[24,128], index: 4, kind: input, shape index: {}]
  %s5 = inlined_call_operand.hbm [shape: f32[1,8,128], index: 5, kind: output, shape index: {}]
  %s6 = sld [smem:[#allocation0]]
  $region58: #{tpu_custom_call.1} parent=0
    _
  %s8 = ssub.s32 1, %s6
  %s9 = scalar_select 0, %s8, %s6
  $region1: #{tpu_custom_call.1} parent=0
    #allocation3 [shape = 'u8[512]{0}', space=smem, size = 0x200, scoped, tag = 'input window, operand 0, single buffered']
    #allocation4 [shape = 's32[1]{0}', space=sflag, size = 0x4, scoped, tag = 'scoped memory for tpu_custom_call.1']
    #allocation5 [shape = 's32[1]{0}', space=sflag, size = 0x4, scoped, tag = 'scoped memory for tpu_custom_call.1']
    #allocation6 [shape = 's32[1]{0}', space=sflag, size = 0x4, scoped, tag = 'scoped memory for tpu_custom_call.1']
    #allocation7 [shape = 's32[1]{0}', space=sflag, size = 0x4, scoped, tag = 'scoped memory for tpu_custom_call.1']
    #allocation8 [shape = 'u8[512]{0}', space=smem, size = 0x200, scoped, tag = 'input window, operand 1, single buffered']
    #allocation9 [shape = 'u8[12288]{0}', space=vmem, size = 0x3000, scoped, tag = 'input window, operand 2, single buffered']
    #allocation10 [shape = 'u8[12288]{0}', space=vmem, size = 0x3000, scoped, tag = 'input window, operand 3, single buffered']
    #allocation11 [shape = 's32[1]{0}', space=sflag, size = 0x4, scoped, tag = 'scoped memory for tpu_custom_call.1']
    #allocation12 [shape = 'u8[12288]{0}', space=vmem, size = 0x3000, scoped, tag = 'input window, operand 4, single buffered']
    #allocation13 [shape = 'u8[4096]{0}', space=vmem, size = 0x1000, scoped, tag = 'output window, operand 0, single buffered']
    %10 = vsyncpa [#allocation6], 0
    %11 = vsyncpa [#allocation7], 0
    %12 = vsyncpa [#allocation4], 0
    %13 = vsyncpa [#allocation11], 0
    %14 = vsyncpa [#allocation5], 0
    // Predicated region
    $region2: #{tpu_custom_call.1} parent=1 // pred_check
      _
    $region3: #{tpu_custom_call.1} parent=1 // pred_check_branch
      %16 = sbr.rel (0) target = $region5
    $region4: #{tpu_custom_call.1} parent=1 // pred_region
      %s18 = ssub.s32 16, 16
      %19 = vsyncadd [#allocation6], %s18
      %22 = dma.hbm_to_smem %s0, 16, [#allocation3], [#allocation6]
    $region5: #{tpu_custom_call.1} parent=1 // pred_fallthru
      _
    // Predicated region
    $region6: #{tpu_custom_call.1} parent=1 // pred_check
      _
    $region7: #{tpu_custom_call.1} parent=1 // pred_check_branch
      %24 = sbr.rel (0) target = $region9
    $region8: #{tpu_custom_call.1} parent=1 // pred_region
      %s26 = ssub.s32 16, 16
      %27 = vsyncadd [#allocation7], %s26
      %s29 = sshll.u32 %s1, 4
      %s30 = int_to_ptr.vmem [resolvable:$true] %s29
      %32 = dma.vmem_to_smem %s30, 16, [#allocation8], [#allocation7]
    $region9: #{tpu_custom_call.1} parent=1 // pred_fallthru
      _
    // Predicated region
    $region10: #{tpu_custom_call.1} parent=1 // pred_check
      _
    $region11: #{tpu_custom_call.1} parent=1 // pred_check_branch
      %34 = sbr.rel (0) target = $region13
    $region12: #{tpu_custom_call.1} parent=1 // pred_region
      %s36 = ssub.s32 384, 384
      %37 = vsyncadd [#allocation4], %s36
      %s38 = sshll.u32 [#allocation9], 4
      %s39 = int_to_ptr.vmem [resolvable:$true] %s38
      %44 = dma.hbm_to_vmem [thread:$0]  %s2, 384, %s39, [#allocation4], 128, 128, 8
    $region13: #{tpu_custom_call.1} parent=1 // pred_fallthru
      _
    // Predicated region
    $region14: #{tpu_custom_call.1} parent=1 // pred_check
      _
    $region15: #{tpu_custom_call.1} parent=1 // pred_check_branch
      %46 = sbr.rel (0) target = $region17
    $region16: #{tpu_custom_call.1} parent=1 // pred_region
      %s47 = sadd.s32 0, 0
      %s48 = smul.u32 3, %s47
      %s50 = ssub.s32 384, 384
      %51 = vsyncadd [#allocation11], %s50
      %s52 = smul.addr %s48, 128
      %s53 = scalar_lea.hbm %s3, %s52
      %s54 = sshll.u32 [#allocation10], 4
      %s55 = int_to_ptr.vmem [resolvable:$true] %s54
      %60 = dma.hbm_to_vmem [thread:$0]  %s53, 384, %s55, [#allocation11], 128, 128, 8
    $region17: #{tpu_custom_call.1} parent=1 // pred_fallthru
      _
    // Predicated region
    $region18: #{tpu_custom_call.1} parent=1 // pred_check
      _
    $region19: #{tpu_custom_call.1} parent=1 // pred_check_branch
      %62 = sbr.rel (0) target = $region21
    $region20: #{tpu_custom_call.1} parent=1 // pred_region
      %s63 = sadd.s32 0, 0
      %s64 = smul.u32 3, %s63
      %s66 = ssub.s32 384, 384
      %67 = vsyncadd [#allocation11], %s66
      %s68 = smul.addr %s64, 128
      %s69 = scalar_lea.hbm %s4, %s68
      %s70 = sshll.u32 [#allocation12], 4
      %s71 = int_to_ptr.vmem [resolvable:$true] %s70
      %76 = dma.hbm_to_vmem [thread:$0]  %s69, 384, %s71, [#allocation11], 128, 128, 8
    $region21: #{tpu_custom_call.1} parent=1 // pred_fallthru
      _
    // Predicated region
    $region22: #{tpu_custom_call.1} parent=1 // pred_check
      _
    $region23: #{tpu_custom_call.1} parent=1 // pred_check_branch
      %78 = sbr.rel (0) target = $region25
    $region24: #{tpu_custom_call.1} parent=1 // pred_region
      %79 = dma.done [#allocation6], 16
    $region25: #{tpu_custom_call.1} parent=1 // pred_fallthru
      _
    // Predicated region
    $region26: #{tpu_custom_call.1} parent=1 // pred_check
      _
    $region27: #{tpu_custom_call.1} parent=1 // pred_check_branch
      %81 = sbr.rel (0) target = $region29
    $region28: #{tpu_custom_call.1} parent=1 // pred_region
      %82 = dma.done [#allocation7], 16
    $region29: #{tpu_custom_call.1} parent=1 // pred_fallthru
      _
    // Predicated region
    $region30: #{tpu_custom_call.1} parent=1 // pred_check
      _
    $region31: #{tpu_custom_call.1} parent=1 // pred_check_branch
      %84 = sbr.rel (0) target = $region33
    $region32: #{tpu_custom_call.1} parent=1 // pred_region
      %85 = dma.done [#allocation4], 384
    $region33: #{tpu_custom_call.1} parent=1 // pred_fallthru
      _
    // Predicated region
    $region34: #{tpu_custom_call.1} parent=1 // pred_check
      _
    $region35: #{tpu_custom_call.1} parent=1 // pred_check_branch
      %87 = sbr.rel (0) target = $region37
    $region36: #{tpu_custom_call.1} parent=1 // pred_region
      %88 = dma.done [#allocation11], 384
    $region37: #{tpu_custom_call.1} parent=1 // pred_fallthru
      _
    // Predicated region
    $region38: #{tpu_custom_call.1} parent=1 // pred_check
      _
    $region39: #{tpu_custom_call.1} parent=1 // pred_check_branch
      %90 = sbr.rel (0) target = $region41
    $region40: #{tpu_custom_call.1} parent=1 // pred_region
      %91 = dma.done [#allocation11], 384
    $region41: #{tpu_custom_call.1} parent=1 // pred_fallthru
      _
    %92 = sfence
    %s93 = sadd.s32 0, 0
    %s94 = smul.u32 3, %s93
    %s95 = sadd.s32 0, 0
    %s96 = smul.u32 3, %s95
    %p97 = scmp.eq.s32.totalorder 0, 0
    // Predicated region
    $region42: #{tpu_custom_call.1} parent=1 // pred_check
      %p98 = pneg %p97
    $region43: #{tpu_custom_call.1} parent=1 // pred_check_branch
      %100 = sbr.rel (%p98) target = $region45
    $region44: #{tpu_custom_call.1} parent=1 // pred_region
      %101 = vst [vmem:[#allocation2] sm:$0xff] 0.0
    $region45: #{tpu_custom_call.1} parent=1 // pred_fallthru
      _
    %v102 = vld [vmem:[#allocation10] sm:$0xff]
    %v103 = vld [vmem:[#allocation10 + $0x8] sm:$0xff]
    %v104 = vld [vmem:[#allocation10 + $0x10] sm:$0xff]
    %v105 = vld [vmem:[#allocation12] sm:$0xff]
    %v106 = vld [vmem:[#allocation12 + $0x8] sm:$0xff]
    %v107 = vld [vmem:[#allocation12 + $0x10] sm:$0xff]
    %v108 = vld [vmem:[#allocation9] sm:$0xff]
    %v109 = vld [vmem:[#allocation9 + $0x8] sm:$0xff]
    %v110 = vld [vmem:[#allocation9 + $0x10] sm:$0xff]
    %v111 = vsub.f32 %v102, %v105
    %v112 = vsub.f32 %v103, %v106
    %v113 = vsub.f32 %v104, %v107
    %v114 = vmul.f32 %v111, %v111
    %v115 = vmul.f32 %v112, %v112
    %v116 = vmul.f32 %v113, %v113
    %s117 = sld [smem:[#allocation3]]
    %v118 = vstv %s117
    %vm119 = vcmp.eq.f32.partialorder %v105, %v118
    %vm120 = vcmp.eq.f32.partialorder %v106, %v118
    %vm121 = vcmp.eq.f32.partialorder %v107, %v118
    %s122 = sld [smem:[#allocation8]]
    %v123 = vstv %s122
    %v124 = vsel %vm119, %v123, 0.0
    %v125 = vsel %vm120, %v123, 0.0
    %v126 = vsel %vm121, %v123, 0.0
    %s127 = sld [smem:[#allocation3 + $0x1]]
    %v128 = vstv %s127
    %vm129 = vcmp.eq.f32.partialorder %v105, %v128
    %vm130 = vcmp.eq.f32.partialorder %v106, %v128
    %vm131 = vcmp.eq.f32.partialorder %v107, %v128
    %s132 = sld [smem:[#allocation8 + $0x1]]
    %v133 = vstv %s132
    %v134 = vsel %vm129, %v133, %v124
    %v135 = vsel %vm130, %v133, %v125
    %v136 = vsel %vm131, %v133, %v126
    %s137 = sld [smem:[#allocation3 + $0x2]]
    %v138 = vstv %s137
    %vm139 = vcmp.eq.f32.partialorder %v105, %v138
    %vm140 = vcmp.eq.f32.partialorder %v106, %v138
    %vm141 = vcmp.eq.f32.partialorder %v107, %v138
    %s142 = sld [smem:[#allocation8 + $0x2]]
    %v143 = vstv %s142
    %v144 = vsel %vm139, %v143, %v134
    %v145 = vsel %vm140, %v143, %v135
    %v146 = vsel %vm141, %v143, %v136
    %s147 = sld [smem:[#allocation3 + $0x3]]
    %v148 = vstv %s147
    %vm149 = vcmp.eq.f32.partialorder %v105, %v148
    %vm150 = vcmp.eq.f32.partialorder %v106, %v148
    %vm151 = vcmp.eq.f32.partialorder %v107, %v148
    %s152 = sld [smem:[#allocation8 + $0x3]]
    %v153 = vstv %s152
    %v154 = vsel %vm149, %v153, %v144
    %v155 = vsel %vm150, %v153, %v145
    %v156 = vsel %vm151, %v153, %v146
    %v157 = vmul.f32 %v154, %v108
    %v158 = vmul.f32 %v155, %v109
    %v159 = vmul.f32 %v156, %v110
    %v160 = vmul.f32 %v114, %v108
    %v161 = vmul.f32 %v115, %v109
    %v162 = vmul.f32 %v116, %v110
    %v163 = vadd.f32 %v157, %v158
    %v164 = vadd.f32 %v163, %v159
    %v165 = vrot.slane %v164, 4
    %v166 = vadd.f32 %v164, %v165
    %v167 = vrot.slane %v166, 2
    %v168 = vadd.f32 %v166, %v167
    %v169 = vrot.slane %v168, 1
    %v170 = vadd.f32 %v168, %v169
    %v171 = vmul.f32 %v157, %v114
    %v172 = vmul.f32 %v158, %v115
    %v173 = vmul.f32 %v159, %v116
    %v174 = vadd.f32 %v171, %v172
    %v175 = vadd.f32 %v174, %v173
    %v176 = vrot.slane %v175, 4
    %v177 = vadd.f32 %v175, %v176
    %v178 = vrot.slane %v177, 2
    %v179 = vadd.f32 %v177, %v178
    %v180 = vrot.slane %v179, 1
    %v181 = vadd.f32 %v179, %v180
    %v182 = vadd.f32 %v114, %v115
    %v183 = vadd.f32 %v182, %v116
    %v184 = vrot.slane %v183, 4
    %v185 = vadd.f32 %v183, %v184
    %v186 = vrot.slane %v185, 2
    %v187 = vadd.f32 %v185, %v186
    %v188 = vrot.slane %v187, 1
    %v189 = vadd.f32 %v187, %v188
    %v190 = vadd.f32 %v160, %v161
    %v191 = vadd.f32 %v190, %v162
    %v192 = vrot.slane %v191, 4
    %v193 = vadd.f32 %v191, %v192
    %v194 = vrot.slane %v193, 2
    %v195 = vadd.f32 %v193, %v194
    %v196 = vrot.slane %v195, 1
    %v197 = vadd.f32 %v195, %v196
    %v198 = vsub.f32 %v189, %v197
    %v199 = vld [vmem:[#allocation2] sm:$0x1]
    %v200 = vadd.f32 %v199, %v170
    %201 = vst [vmem:[#allocation2] sm:$0x1] %v200
    %v202 = vld [vmem:[#allocation2 + $0x1] sm:$0x1]
    %v203 = vadd.f32 %v202, %v181
    %204 = vst [vmem:[#allocation2 + $0x1] sm:$0x1] %v203
    %v205 = vld [vmem:[#allocation2 + $0x2] sm:$0x1]
    %v206 = vadd.f32 %v205, %v198
    %207 = vst [vmem:[#allocation2 + $0x2] sm:$0x1] %v206
    // Predicated region
    $region46: #{tpu_custom_call.1} parent=1 // pred_check
      %p208 = pneg %p97
    $region47: #{tpu_custom_call.1} parent=1 // pred_check_branch
      %210 = sbr.rel (%p208) target = $region49
    $region48: #{tpu_custom_call.1} parent=1 // pred_region
      %v211 = vld [vmem:[#allocation2] sm:$0xff]
      %212 = vst [vmem:[#allocation13] sm:$0xff] %v211
    $region49: #{tpu_custom_call.1} parent=1 // pred_fallthru
      _
    // Predicated region
    $region50: #{tpu_custom_call.1} parent=1 // pred_check
      _
    $region51: #{tpu_custom_call.1} parent=1 // pred_check_branch
      %214 = sbr.rel (0) target = $region53
    $region52: #{tpu_custom_call.1} parent=1 // pred_region
      %s216 = ssub.s32 128, 128
      %217 = vsyncadd [#allocation5], %s216
      %s219 = sshll.u32 [#allocation13], 4
      %s220 = int_to_ptr.vmem [resolvable:$true] %s219
      %222 = dma.vmem_to_hbm [thread:$0]  %s220, 128, %s5, [#allocation5]
    $region53: #{tpu_custom_call.1} parent=1 // pred_fallthru
      _
    // Predicated region
    $region54: #{tpu_custom_call.1} parent=1 // pred_check
      _
    $region55: #{tpu_custom_call.1} parent=1 // pred_check_branch
      %224 = sbr.rel (0) target = $region57
    $region56: #{tpu_custom_call.1} parent=1 // pred_region
      %225 = dma.done [#allocation5], 128
    $region57: #{tpu_custom_call.1} parent=1 // pred_fallthru
      _
    %226 = vsyncpa [#allocation4], 1
    %227 = vsyncpa [#allocation11], 1
    %228 = vsyncpa [#allocation5], 1
    %229 = vsyncpa [#allocation6], 1
    %230 = vsyncpa [#allocation7], 1

</llo_original>
